<compile_context>
chip_gen: v7x
topology: tpu7x:2x2x1
jax: 0.10.0
libtpu: 0.0.40
codegen_flags: <defaults>
</compile_context>

<pallas_src>
import jax
import jax.numpy as jnp
from jax.experimental import pallas as pl
from jax.experimental.pallas import tpu as pltpu


def _drop_path_kernel(scale_ref, x_ref, o_ref):
    # scale_ref: (B, 1) per-sample keep * 1/keep_prob factor (native dtype).
    # x_ref / o_ref: (B, Ft) lane-dense feature tile.
    o_ref[...] = x_ref[...] * scale_ref[...]


def _round_up(v, m):
    return ((v + m - 1) // m) * m


def drop_path_pallas(x, key, drop_prob=0.0, training=False, scale_by_keep=True):
    """Pallas implementation of timm-style drop_path.

    x:   (B, ...) array (any floating dtype), e.g. NCHW activations.
    key: jax PRNG key used for the per-sample Bernoulli draw.
    """
    if drop_prob == 0.0 or not training:
        return x

    keep_prob = 1.0 - drop_prob
    B = x.shape[0]
    F = 1
    for d in x.shape[1:]:
        F *= d

    # Per-sample mask with shape (B, 1) -> broadcast over all non-batch dims,
    # matching x.new_empty((B,1,...,1)).bernoulli_(keep_prob) semantics.
    keep = jax.random.bernoulli(key, p=keep_prob, shape=(B, 1))
    scale_val = (1.0 / keep_prob) if (scale_by_keep and keep_prob > 0.0) else 1.0
    scale = keep.astype(x.dtype) * jnp.asarray(scale_val, dtype=x.dtype)

    x2 = x.reshape(B, F)

    # Lane-dense tiling over the feature axis: Ft is a multiple of 128 and the
    # (B, Ft) block is capped at ~2 MiB so double-buffered in+out buffers stay
    # far below the scoped-VMEM limit on every TPU generation (incl. v7x).
    itemsize = jnp.dtype(x.dtype).itemsize
    f_pad = _round_up(F, 128)
    target_block_bytes = 2 * 1024 * 1024
    ft = max(128, (target_block_bytes // (B * itemsize)) // 128 * 128)
    ft = min(ft, f_pad)
    f_tot = _round_up(f_pad, ft)
    if f_tot != F:
        x2 = jnp.pad(x2, ((0, 0), (0, f_tot - F)))

    grid = (f_tot // ft,)

    out = pl.pallas_call(
        _drop_path_kernel,
        out_shape=jax.ShapeDtypeStruct((B, f_tot), x.dtype),
        grid=grid,
        in_specs=[
            pl.BlockSpec((B, 1), lambda j: (0, 0)),    # per-sample scale (tiny)
            pl.BlockSpec((B, ft), lambda j: (0, j)),   # feature tile
        ],
        out_specs=pl.BlockSpec((B, ft), lambda j: (0, j)),
        input_output_aliases={1: 0},                   # reuse x2's HBM buffer
        compiler_params=pltpu.CompilerParams(
            dimension_semantics=("parallel",),         # megacore-shardable
            vmem_limit_bytes=32 * 1024 * 1024,
        ),
    )(scale, x2)

    return out[:, :F].reshape(x.shape)


if __name__ == "__main__":
    key = jax.random.PRNGKey(0)
    k_data, k_drop = jax.random.split(key)
    x = jax.random.normal(k_data, (2, 4, 16, 16), dtype=jnp.float32)

    # Module "parameters": drop_prob / scale_by_keep (no learnable weights).
    drop_prob = 0.25
    scale_by_keep = True

    # Training mode -> stochastic path (kernel runs).
    y_train = drop_path_pallas(
        x, k_drop, drop_prob=drop_prob, training=True, scale_by_keep=scale_by_keep
    )
    y_train = jax.block_until_ready(y_train)

    # Eval mode -> identity (matches PyTorch semantics).
    y_eval = drop_path_pallas(
        x, k_drop, drop_prob=drop_prob, training=False, scale_by_keep=scale_by_keep
    )
    y_eval = jax.block_until_ready(y_eval)

    # Sanity checks: eval path is exact identity; train path per-sample is
    # either all-zero or x/keep_prob for each batch row.
    assert jnp.allclose(y_eval, x)
    keep_prob = 1.0 - drop_prob
    for b in range(x.shape[0]):
        row_y = y_train[b]
        row_x = x[b]
        is_zero = bool(jnp.all(row_y == 0.0))
        is_scaled = bool(jnp.allclose(row_y, row_x / keep_prob, rtol=1e-5, atol=1e-5))
        assert is_zero or is_scaled, f"batch {b}: neither dropped nor scaled-kept"

    print("KERNEL_OK")
</pallas_src>

<mosaic_0001>
module attributes {stable_mosaic.version = 11 : i64} {
  func.func @_drop_path_kernel(%arg0: i32, %arg1: memref<2x1xf32, #tpu.memory_space<vmem>>, %arg2: memref<2x1024xf32, #tpu.memory_space<vmem>>, %arg3: memref<2x1024xf32, #tpu.memory_space<vmem>>) attributes {dimension_semantics = [#tpu.dimension_semantics<parallel>], iteration_bounds = array<i64: 1>, scalar_prefetch = 0 : i64, scratch_operands = 0 : i64, tpu.core_type = #tpu.core_type<tc>, window_params = [{pipeline_mode = #tpu.pipeline_mode<synchronous>, transform_indices = @transform_0, window_bounds = array<i64: 2, 1>}, {transform_indices = @transform_1, window_bounds = array<i64: 2, 1024>}, {transform_indices = @transform_2, window_bounds = array<i64: 2, 1024>}]} {
    %c0 = arith.constant 0 : index
    %c0_0 = arith.constant 0 : index
    %0 = vector.load %arg2[%c0, %c0_0] : memref<2x1024xf32, #tpu.memory_space<vmem>>, vector<2x1024xf32>
    %c0_1 = arith.constant 0 : index
    %c0_2 = arith.constant 0 : index
    %1 = vector.load %arg1[%c0_1, %c0_2] : memref<2x1xf32, #tpu.memory_space<vmem>>, vector<2x1xf32>
    %2 = vector.broadcast %1 : vector<2x1xf32> to vector<2x1024xf32>
    %3 = arith.mulf %0, %2 : vector<2x1024xf32>
    %c0_3 = arith.constant 0 : index
    %c0_4 = arith.constant 0 : index
    %4 = vector.load %arg3[%c0_3, %c0_4] : memref<2x1024xf32, #tpu.memory_space<vmem>>, vector<2x1024xf32>
    tpu.vector_store %arg3[%c0_3, %c0_4], %3 {strides = array<i32>} : memref<2x1024xf32, #tpu.memory_space<vmem>>, vector<2x1024xf32>,
    return
  }
  func.func @transform_0(%arg0: i32) -> (i32, i32) {
    %c0_i32 = arith.constant 0 : i32
    %c0_i32_0 = arith.constant 0 : i32
    %c0_i32_1 = arith.constant 0 : i32
    return %c0_i32, %c0_i32_0 : i32, i32
  }
  func.func @transform_1(%arg0: i32) -> (i32, i32) {
    %c0_i32 = arith.constant 0 : i32
    %c0_i32_0 = arith.constant 0 : i32
    return %c0_i32, %arg0 : i32, i32
  }
  func.func @transform_2(%arg0: i32) -> (i32, i32) {
    %c0_i32 = arith.constant 0 : i32
    %c0_i32_0 = arith.constant 0 : i32
    return %c0_i32, %arg0 : i32, i32
  }
}

</mosaic_0001>

<llo_original>
// kernel: tpu_custom_call.1
$region0: #{tpu_custom_call.1}
  #allocation0 [shape = 'u32[]', space=smem, size = 0x4, offset = 0x4, fixed_abs, tag = 'smem constant byte address 0x4 - core index']
  #allocation1 [shape = 'u32[144,128]{1,0:T(1,128)}', space=vmem, size = 0x12000, scoped, tag = 'internal scratch']
  %s0 = inlined_call_operand.vmem [shape: f32[2,1], index: 0, kind: input, shape index: {}]
  %s1 = inlined_call_operand.hbm [shape: f32[2,1024], index: 1, kind: input, shape index: {}, may-alias: {1,2}]
  %s2 = inlined_call_operand.hbm [shape: f32[2,1024], index: 2, kind: output, shape index: {}, may-alias: {1,2}]
  %s3 = sld [smem:[#allocation0]]
  $region22: #{tpu_custom_call.1} parent=0
    _
  %s5 = ssub.s32 1, %s3
  %s6 = scalar_select 0, %s5, %s3
  $region1: #{tpu_custom_call.1} parent=0
    #allocation2 [shape = 'u8[8192]{0}', space=vmem, size = 0x2000, scoped, tag = 'input window, operand 1, single buffered']
    #allocation3 [shape = 's32[1]{0}', space=sflag, size = 0x4, scoped, tag = 'scoped memory for tpu_custom_call.1']
    #allocation4 [shape = 's32[1]{0}', space=sflag, size = 0x4, scoped, tag = 'scoped memory for tpu_custom_call.1']
    #allocation5 [shape = 'u8[8192]{0}', space=vmem, size = 0x2000, scoped, tag = 'output window, operand 0, single buffered']
    %7 = vsyncpa [#allocation3], 0
    %8 = vsyncpa [#allocation4], 0
    // Predicated region
    $region2: #{tpu_custom_call.1} parent=1 // pred_check
      _
    $region3: #{tpu_custom_call.1} parent=1 // pred_check_branch
      %10 = sbr.rel (0) target = $region5
    $region4: #{tpu_custom_call.1} parent=1 // pred_region
      _
    $region5: #{tpu_custom_call.1} parent=1 // pred_fallthru
      _
    // Predicated region
    $region6: #{tpu_custom_call.1} parent=1 // pred_check
      _
    $region7: #{tpu_custom_call.1} parent=1 // pred_check_branch
      %12 = sbr.rel (0) target = $region9
    $region8: #{tpu_custom_call.1} parent=1 // pred_region
      %s14 = ssub.s32 256, 256
      %15 = vsyncadd [#allocation3], %s14
      %s17 = sshll.u32 [#allocation2], 4
      %s18 = int_to_ptr.vmem [resolvable:$true] %s17
      %20 = dma.hbm_to_vmem [thread:$0]  %s1, 256, %s18, [#allocation3]
    $region9: #{tpu_custom_call.1} parent=1 // pred_fallthru
      _
    // Predicated region
    $region10: #{tpu_custom_call.1} parent=1 // pred_check
      _
    $region11: #{tpu_custom_call.1} parent=1 // pred_check_branch
      %22 = sbr.rel (0) target = $region13
    $region12: #{tpu_custom_call.1} parent=1 // pred_region
      %23 = dma.done [#allocation3], 256
    $region13: #{tpu_custom_call.1} parent=1 // pred_fallthru
      _
    %v24 = vld [vmem:[#allocation2] sm:$0xff]
    %v25 = vld [vmem:[#allocation2 + $0x8] sm:$0xff]
    %v26 = vld [vmem:[%s0] sm:$0x3]
    %28 = vset.pattern.permute.xlu0 0
    %29 = vperm.xlu0 %28, %v26
    %v30 = vpop.permute.xlu0 %29
    %v32 = vunpack.c.l.s4 269488144
    %v33 = vunpack.c.0.s8 %v32
    %v34 = vlaneseq
    %v35 = vshrl.u32 %v34, 7
    %v36 = vsub.s32 %v33, %v35
    %v37 = vrot.slane %v30, %v36
    %v39 = vmul.f32 %v24, %v37
    %v40 = vmul.f32 %v25, %v37
    %41 = vst [vmem:[#allocation5] sm:$0xff] %v39
    %42 = vst [vmem:[#allocation5 + $0x8] sm:$0xff] %v40
    // Predicated region
    $region14: #{tpu_custom_call.1} parent=1 // pred_check
      _
    $region15: #{tpu_custom_call.1} parent=1 // pred_check_branch
      %44 = sbr.rel (0) target = $region17
    $region16: #{tpu_custom_call.1} parent=1 // pred_region
      %s46 = ssub.s32 256, 256
      %47 = vsyncadd [#allocation4], %s46
      %s49 = sshll.u32 [#allocation5], 4
      %s50 = int_to_ptr.vmem [resolvable:$true] %s49
      %52 = dma.vmem_to_hbm [thread:$0]  %s50, 256, %s2, [#allocation4]
    $region17: #{tpu_custom_call.1} parent=1 // pred_fallthru
      _
    // Predicated region
    $region18: #{tpu_custom_call.1} parent=1 // pred_check
      _
    $region19: #{tpu_custom_call.1} parent=1 // pred_check_branch
      %54 = sbr.rel (0) target = $region21
    $region20: #{tpu_custom_call.1} parent=1 // pred_region
      %55 = dma.done [#allocation4], 256
    $region21: #{tpu_custom_call.1} parent=1 // pred_fallthru
      _
    %56 = vsyncpa [#allocation3], 1
    %57 = vsyncpa [#allocation4], 1

</llo_original>
